<compile_context>
chip_gen: v7x
topology: tpu7x:2x2x1
jax: 0.10.0
libtpu: 0.0.40
codegen_flags: <defaults>
</compile_context>

<pallas_src>
import jax
import jax.numpy as jnp
import numpy as np
from jax.experimental import pallas as pl
from jax.experimental.pallas import tpu as pltpu

_LANE = 128


def _kan_kernel(xs_ref, w_ref, grid_ref, out_ref, acc_ref):
    """One (core, k) tile of the fused BI = batch*in_features reduction.

    xs_ref  : (2, T)  row 0 = x, row 1 = spline_scaler (lane-dense, BI on lanes)
    w_ref   : (G, T)  spline_weight, pre-transposed to (G, BI) and pre-padded
    grid_ref: (G, 1)  grid points on sublanes
    out_ref : (G, 1)  per-core partial sum (written once, at the last k)
    acc_ref : (G, T)  f32 scratch accumulator, resident across the k axis
    """
    k = pl.program_id(1)

    x_row = xs_ref[0:1, :]                            # (1, T)
    s_row = xs_ref[1:2, :]                            # (1, T)
    xn = jnp.tanh(x_row / s_row)                      # (1, T)   EUP

    dist = jnp.abs(xn - grid_ref[...])                # (G, T)   VPU
    basis = jnp.exp(-(dist * dist * dist))            # spline_order == 3, EUP
    bsum = jnp.sum(basis, axis=0, keepdims=True)      # (1, T)   sublane reduce
    inv = pl.reciprocal(bsum + 1e-8, approx=False)    # (1, T)
    weighted = w_ref[...] * (basis * inv)             # (G, T)   VPU

    @pl.when(k == 0)
    def _():
        acc_ref[...] = jnp.zeros_like(acc_ref)

    acc_ref[...] += weighted                          # dense elementwise accumulate

    @pl.when(k == pl.num_programs(1) - 1)
    def _():
        # Single lane-reduce + single (G, 1) store per core.
        out_ref[...] = jnp.sum(acc_ref[...], axis=1, keepdims=True)


def _plan(BI, G, num_cores, max_tile_lanes, vmem_budget_bytes):
    """Pick a lane-aligned BI tile that fits the (double-buffered) VMEM budget."""
    per_core = pl.cdiv(BI, num_cores)
    per_core = pl.cdiv(per_core, _LANE) * _LANE
    # 2x double-buffered xs (2 rows) + 2x double-buffered w (G rows) + scratch (G rows)
    by_vmem = vmem_budget_bytes // (4 * (3 * G + 4))
    by_vmem = max(_LANE, (by_vmem // _LANE) * _LANE)
    tile = min(per_core, int(max_tile_lanes), by_vmem)
    tile = max(_LANE, (tile // _LANE) * _LANE)
    steps = pl.cdiv(per_core, tile)
    return tile, steps


def make_enhanced_kan_forward(spline_weight, spline_scaler, bias, grid_points, *,
                              num_cores=1, max_tile_lanes=32768,
                              vmem_budget_bytes=24 * 1024 * 1024):
    """One-time parameter prep + jitted forward (literal torch semantics).

    The spline_weight reshape/transpose/pad happens here ONCE (parameter-init
    time), not per forward call, so each forward streams the largest tensor
    from HBM exactly once.
    """
    f32 = jnp.float32
    O, I, G = spline_weight.shape
    if O != G:
        raise ValueError("torch forward only broadcasts when out_features == grid_size")
    BI = O * I

    tile, steps = _plan(BI, G, num_cores, max_tile_lanes, vmem_budget_bytes)
    bi_pad = tile * steps * num_cores
    pad = bi_pad - BI

    # Lane-dense layout: BI on lanes, G on sublanes.  Prepared once.
    w_t = jnp.asarray(spline_weight, f32).reshape(BI, G).T          # (G, BI)
    s_row = jnp.asarray(spline_scaler, f32).reshape(1, BI)          # (1, BI)
    if pad:
        w_t = jnp.pad(w_t, ((0, 0), (0, pad)))                      # 0 weight -> 0 contribution
        s_row = jnp.pad(s_row, ((0, 0), (0, pad)),
                        constant_values=1.0)                        # avoid 0/0 in pad region
    grid_col = jnp.asarray(grid_points, f32).reshape(G, 1)
    bias_vec = jnp.asarray(bias, f32).reshape(G)                    # needs O == G (literal semantics)

    # VMEM: double-buffered xs + w blocks, plus the scratch accumulator.
    vmem_need = 4 * tile * (2 * 2 + 2 * G + G) + 4 * 4 * G
    vmem_limit = int(min(max(vmem_need + (8 << 20), 32 << 20), 48 << 20))

    kan_call = pl.pallas_call(
        _kan_kernel,
        out_shape=jax.ShapeDtypeStruct((num_cores, G, 1), f32),
        grid=(num_cores, steps),                                    # reduction axis last
        in_specs=[
            pl.BlockSpec((2, tile), lambda c, k: (0, c * steps + k)),   # packed x / scaler
            pl.BlockSpec((G, tile), lambda c, k: (0, c * steps + k)),   # spline_weight^T tile
            pl.BlockSpec((G, 1), lambda c, k: (0, 0)),                  # grid points
        ],
        out_specs=pl.BlockSpec((None, G, 1), lambda c, k: (c, 0, 0)),   # per-core partial
        scratch_shapes=[pltpu.VMEM((G, tile), f32)],
        compiler_params=pltpu.CompilerParams(
            dimension_semantics=("parallel", "arbitrary"),
            vmem_limit_bytes=vmem_limit),
    )

    @jax.jit
    def forward(x):
        assert x.shape == (O, I), \
            "torch forward only broadcasts when batch_size == out_features"
        x_row = x.reshape(1, BI).astype(f32)
        if pad:
            x_row = jnp.pad(x_row, ((0, 0), (0, pad)))
        xs = jnp.concatenate([x_row, s_row], axis=0)                # (2, bi_pad)
        partials = kan_call(xs, w_t, grid_col)                      # (num_cores, G, 1)
        out = jnp.sum(partials[:, :, 0], axis=0) + bias_vec         # bias added exactly once
        return out.reshape(1, 1, G)

    return forward


def _reference_forward(x, spline_weight, spline_scaler, bias, grid_points):
    """Plain-JAX transcription of the torch forward (same literal broadcasting)."""
    xn = jnp.tanh(x / spline_scaler[None, :, :])                    # (1, B, I)
    dist = jnp.abs(xn[..., None] - grid_points[None, None, :])      # (1, B, I, G)
    basis = jnp.exp(-(dist ** 3))
    bnorm = basis / (jnp.sum(basis, axis=-1, keepdims=True) + 1e-8)
    weighted = spline_weight[None] * bnorm[:, None]                 # (1, 1, B, I, G)
    return jnp.sum(weighted, axis=(2, 3)) + bias[None]              # (1, 1, G)


if __name__ == "__main__":
    # Small shapes consistent with the module's implicit broadcasting constraints.
    in_features = 64
    out_features = 8
    grid_size = 8
    batch = out_features          # required by the literal torch semantics

    key = jax.random.PRNGKey(0)
    k_w, k_s, k_b, k_x = jax.random.split(key, 4)

    spline_weight = jax.random.normal(
        k_w, (out_features, in_features, grid_size), dtype=jnp.float32)
    spline_scaler = 1.0 + 0.1 * jax.random.normal(
        k_s, (out_features, in_features), dtype=jnp.float32)
    bias = 0.1 * jax.random.normal(k_b, (out_features,), dtype=jnp.float32)
    grid_points = jnp.linspace(-2.0, 2.0, grid_size, dtype=jnp.float32)
    x = jax.random.normal(k_x, (batch, in_features), dtype=jnp.float32)

    ref = _reference_forward(x, spline_weight, spline_scaler, bias, grid_points)

    # Single-core path: BI = 512 fits one tile -> a single grid step.
    fwd1 = make_enhanced_kan_forward(spline_weight, spline_scaler, bias, grid_points,
                                     num_cores=1)
    out1 = jax.block_until_ready(fwd1(x))
    np.testing.assert_allclose(np.asarray(out1), np.asarray(ref), rtol=2e-5, atol=2e-5)

    # Dual-core path (v7x: half of BI per TensorCore; 1-TC chips just loop).
    fwd2 = make_enhanced_kan_forward(spline_weight, spline_scaler, bias, grid_points,
                                     num_cores=2)
    out2 = jax.block_until_ready(fwd2(x))
    np.testing.assert_allclose(np.asarray(out2), np.asarray(ref), rtol=2e-5, atol=2e-5)

    print("KERNEL_OK")
</pallas_src>

<mosaic_0001>
module attributes {stable_mosaic.version = 11 : i64} {
  func.func @_kan_kernel(%arg0: i32, %arg1: i32, %arg2: memref<2x512xf32, #tpu.memory_space<vmem>>, %arg3: memref<8x512xf32, #tpu.memory_space<vmem>>, %arg4: memref<8x1xf32, #tpu.memory_space<vmem>>, %arg5: memref<1x8x1xf32, #tpu.memory_space<vmem>>, %arg6: memref<8x512xf32, #tpu.memory_space<vmem>>) attributes {dimension_semantics = [#tpu.dimension_semantics<parallel>, #tpu.dimension_semantics<arbitrary>], iteration_bounds = array<i64: 1, 1>, scalar_prefetch = 0 : i64, scratch_operands = 1 : i64, tpu.core_type = #tpu.core_type<tc>, window_params = [{transform_indices = @transform_0, window_bounds = array<i64: 2, 512>}, {transform_indices = @transform_1, window_bounds = array<i64: 8, 512>}, {pipeline_mode = #tpu.pipeline_mode<synchronous>, transform_indices = @transform_2, window_bounds = array<i64: 8, 1>}, {transform_indices = @transform_3, window_bounds = array<i64: 1, 8, 1>}]} {
    %c0 = arith.constant 0 : index
    %c0_0 = arith.constant 0 : index
    %0 = vector.load %arg2[%c0, %c0_0] : memref<2x512xf32, #tpu.memory_space<vmem>>, vector<1x512xf32>
    %c1 = arith.constant 1 : index
    %c0_1 = arith.constant 0 : index
    %1 = vector.load %arg2[%c1, %c0_1] : memref<2x512xf32, #tpu.memory_space<vmem>>, vector<1x512xf32>
    %2 = arith.divf %0, %1 : vector<1x512xf32>
    %3 = math.tanh %2 : vector<1x512xf32>
    %c0_2 = arith.constant 0 : index
    %c0_3 = arith.constant 0 : index
    %4 = vector.load %arg4[%c0_2, %c0_3] : memref<8x1xf32, #tpu.memory_space<vmem>>, vector<8x1xf32>
    %5 = vector.broadcast %3 : vector<1x512xf32> to vector<8x512xf32>
    %6 = vector.broadcast %4 : vector<8x1xf32> to vector<8x512xf32>
    %7 = arith.subf %5, %6 : vector<8x512xf32>
    %8 = math.absf %7 : vector<8x512xf32>
    %9 = arith.mulf %8, %8 : vector<8x512xf32>
    %10 = arith.mulf %9, %8 : vector<8x512xf32>
    %cst = arith.constant 0.000000e+00 : f32
    %11 = vector.broadcast %cst : f32 to vector<8x512xf32>
    %12 = arith.subf %11, %10 : vector<8x512xf32>
    %13 = math.exp %12 : vector<8x512xf32>
    %cst_4 = arith.constant dense<0.000000e+00> : vector<512xf32>
    %14 = vector.multi_reduction <add>, %13, %cst_4 [0] : vector<8x512xf32> to vector<512xf32>
    %15 = vector.shape_cast %14 : vector<512xf32> to vector<1x512xf32>
    %cst_5 = arith.constant 9.99999993E-9 : f32
    %16 = vector.broadcast %cst_5 : f32 to vector<1x512xf32>
    %17 = arith.addf %15, %16 : vector<1x512xf32>
    %18 = tpu.reciprocal %17 : vector<1x512xf32> -> vector<1x512xf32>
    %c0_6 = arith.constant 0 : index
    %c0_7 = arith.constant 0 : index
    %19 = vector.load %arg3[%c0_6, %c0_7] : memref<8x512xf32, #tpu.memory_space<vmem>>, vector<8x512xf32>
    %20 = vector.broadcast %18 : vector<1x512xf32> to vector<8x512xf32>
    %21 = arith.mulf %13, %20 : vector<8x512xf32>
    %22 = arith.mulf %19, %21 : vector<8x512xf32>
    %c0_i32 = arith.constant 0 : i32
    %23 = arith.cmpi eq, %arg1, %c0_i32 : i32
    %24 = arith.extui %23 : i1 to i32
    %c0_i32_8 = arith.constant 0 : i32
    %25 = arith.cmpi ne, %24, %c0_i32_8 : i32
    scf.if %25 {
      %cst_15 = arith.constant 0.000000e+00 : f32
      %32 = vector.broadcast %cst_15 : f32 to vector<8x512xf32>
      %c0_16 = arith.constant 0 : index
      %c0_17 = arith.constant 0 : index
      %33 = vector.load %arg6[%c0_16, %c0_17] : memref<8x512xf32, #tpu.memory_space<vmem>>, vector<8x512xf32>
      tpu.vector_store %arg6[%c0_16, %c0_17], %32 {strides = array<i32>} : memref<8x512xf32, #tpu.memory_space<vmem>>, vector<8x512xf32>,
    } else {
    }
    %c0_9 = arith.constant 0 : index
    %c0_10 = arith.constant 0 : index
    %26 = vector.load %arg6[%c0_9, %c0_10] : memref<8x512xf32, #tpu.memory_space<vmem>>, vector<8x512xf32>
    %27 = arith.addf %26, %22 : vector<8x512xf32>
    %c0_11 = arith.constant 0 : index
    %c0_12 = arith.constant 0 : index
    %28 = vector.load %arg6[%c0_11, %c0_12] : memref<8x512xf32, #tpu.memory_space<vmem>>, vector<8x512xf32>
    tpu.vector_store %arg6[%c0_11, %c0_12], %27 {strides = array<i32>} : memref<8x512xf32, #tpu.memory_space<vmem>>, vector<8x512xf32>,
    %c0_i32_13 = arith.constant 0 : i32
    %29 = arith.cmpi eq, %arg1, %c0_i32_13 : i32
    %30 = arith.extui %29 : i1 to i32
    %c0_i32_14 = arith.constant 0 : i32
    %31 = arith.cmpi ne, %30, %c0_i32_14 : i32
    scf.if %31 {
      %c0_15 = arith.constant 0 : index
      %c0_16 = arith.constant 0 : index
      %32 = vector.load %arg6[%c0_15, %c0_16] : memref<8x512xf32, #tpu.memory_space<vmem>>, vector<8x512xf32>
      %cst_17 = arith.constant dense<0.000000e+00> : vector<8xf32>
      %33 = vector.multi_reduction <add>, %32, %cst_17 [1] : vector<8x512xf32> to vector<8xf32>
      %34 = vector.shape_cast %33 : vector<8xf32> to vector<8x1xf32>
      %c0_18 = arith.constant 0 : index
      %c0_19 = arith.constant 0 : index
      %c0_20 = arith.constant 0 : index
      %35 = vector.load %arg5[%c0_18, %c0_19, %c0_20] : memref<1x8x1xf32, #tpu.memory_space<vmem>>, vector<1x8x1xf32>
      %36 = vector.shape_cast %35 : vector<1x8x1xf32> to vector<8x1xf32>
      %37 = vector.shape_cast %34 : vector<8x1xf32> to vector<1x8x1xf32>
      tpu.vector_store %arg5[%c0_18, %c0_19, %c0_20], %37 {strides = array<i32>} : memref<1x8x1xf32, #tpu.memory_space<vmem>>, vector<1x8x1xf32>,
    } else {
    }
    return
  }
  func.func @transform_0(%arg0: i32, %arg1: i32) -> (i32, i32) {
    %c1_i32 = arith.constant 1 : i32
    %0 = arith.muli %arg0, %c1_i32 : i32
    %1 = arith.addi %0, %arg1 : i32
    %c0_i32 = arith.constant 0 : i32
    %c0_i32_0 = arith.constant 0 : i32
    return %c0_i32, %1 : i32, i32
  }
  func.func @transform_1(%arg0: i32, %arg1: i32) -> (i32, i32) {
    %c1_i32 = arith.constant 1 : i32
    %0 = arith.muli %arg0, %c1_i32 : i32
    %1 = arith.addi %0, %arg1 : i32
    %c0_i32 = arith.constant 0 : i32
    %c0_i32_0 = arith.constant 0 : i32
    return %c0_i32, %1 : i32, i32
  }
  func.func @transform_2(%arg0: i32, %arg1: i32) -> (i32, i32) {
    %c0_i32 = arith.constant 0 : i32
    %c0_i32_0 = arith.constant 0 : i32
    %c0_i32_1 = arith.constant 0 : i32
    return %c0_i32, %c0_i32_0 : i32, i32
  }
  func.func @transform_3(%arg0: i32, %arg1: i32) -> (i32, i32, i32) {
    %c0_i32 = arith.constant 0 : i32
    %c0_i32_0 = arith.constant 0 : i32
    %c0_i32_1 = arith.constant 0 : i32
    return %arg0, %c0_i32, %c0_i32_0 : i32, i32, i32
  }
}

</mosaic_0001>

<llo_original>
// kernel: forward.1
$region0: #{forward.1}
  #allocation0 [shape = 'u32[]', space=smem, size = 0x4, offset = 0x4, fixed_abs, tag = 'smem constant byte address 0x4 - core index']
  #allocation1 [shape = 'u32[144,128]{1,0:T(1,128)}', space=vmem, size = 0x12000, scoped, tag = 'internal scratch']
  #allocation2 [shape = 'f32[8,512]{1,0:T(8,128)}', space=vmem, size = 0x4000, scoped, tag = 'scratch operand']
  %s0 = inlined_call_operand.vmem [shape: f32[2,512], index: 0, kind: input, shape index: {}]
  %s1 = inlined_call_operand.vmem [shape: f32[8,512], index: 1, kind: input, shape index: {}]
  %s2 = inlined_call_operand.hbm [shape: f32[8,1], index: 2, kind: input, shape index: {}]
  %s3 = inlined_call_operand.vmem [shape: f32[1,8,1], index: 3, kind: output, shape index: {}]
  %s4 = sld [smem:[#allocation0]]
  $region34: #{forward.1} parent=0
    _
  %s6 = ssub.s32 1, %s4
  %s7 = scalar_select 0, %s6, %s4
  $region1: #{forward.1} parent=0
    #allocation3 [shape = 'u8[4096]{0}', space=vmem, size = 0x1000, scoped, tag = 'input window, operand 2, single buffered']
    #allocation4 [shape = 's32[1]{0}', space=sflag, size = 0x4, scoped, tag = 'scoped memory for forward.1']
    %8 = vsyncpa [#allocation4], 0
    // Predicated region
    $region2: #{forward.1} parent=1 // pred_check
      _
    $region3: #{forward.1} parent=1 // pred_check_branch
      %10 = sbr.rel (0) target = $region5
    $region4: #{forward.1} parent=1 // pred_region
      %s11 = sadd.s32 0, 0
      %s12 = smul.u32 4, %s11
      %p13 = scmp.lt.s32.totalorder %s12, 3
      %s14 = scalar_select %p13, %s12, 3
      %s15 = smul.addr %s14, 2
      %s16 = scalar_lea.vmem %s0, %s15
      %s17 = sadd.s32 0, 0
      %s18 = smul.u32 4, %s17
    $region5: #{forward.1} parent=1 // pred_fallthru
      _
    // Predicated region
    $region6: #{forward.1} parent=1 // pred_check
      _
    $region7: #{forward.1} parent=1 // pred_check_branch
      %20 = sbr.rel (0) target = $region9
    $region8: #{forward.1} parent=1 // pred_region
      %s21 = sadd.s32 0, 0
      %s22 = smul.u32 4, %s21
      %p23 = scmp.lt.s32.totalorder %s22, 3
      %s24 = scalar_select %p23, %s22, 3
      %s25 = smul.addr %s24, 8
      %s26 = scalar_lea.vmem %s1, %s25
      %s27 = sadd.s32 0, 0
      %s28 = smul.u32 4, %s27
    $region9: #{forward.1} parent=1 // pred_fallthru
      _
    // Predicated region
    $region10: #{forward.1} parent=1 // pred_check
      _
    $region11: #{forward.1} parent=1 // pred_check_branch
      %30 = sbr.rel (0) target = $region13
    $region12: #{forward.1} parent=1 // pred_region
      %s32 = ssub.s32 128, 128
      %33 = vsyncadd [#allocation4], %s32
      %s35 = sshll.u32 [#allocation3], 4
      %s36 = int_to_ptr.vmem [resolvable:$true] %s35
      %38 = dma.hbm_to_vmem [thread:$0]  %s2, 128, %s36, [#allocation4]
    $region13: #{forward.1} parent=1 // pred_fallthru
      _
    // Predicated region
    $region14: #{forward.1} parent=1 // pred_check
      _
    $region15: #{forward.1} parent=1 // pred_check_branch
      %40 = sbr.rel (0) target = $region17
    $region16: #{forward.1} parent=1 // pred_region
      %41 = dma.done [#allocation4], 128
    $region17: #{forward.1} parent=1 // pred_fallthru
      _
    %s42 = sadd.s32 0, 0
    %s43 = smul.u32 4, %s42
    %p44 = scmp.lt.s32.totalorder %s43, 3
    %s45 = scalar_select %p44, %s43, 3
    %s46 = smul.addr %s45, 2
    %s47 = scalar_lea.vmem %s0, %s46
    %s48 = sadd.s32 0, 0
    %s49 = smul.u32 4, %s48
    %p50 = scmp.lt.s32.totalorder %s49, 3
    %s51 = scalar_select %p50, %s49, 3
    %s52 = smul.addr %s51, 8
    %s53 = scalar_lea.vmem %s1, %s52
    %s54 = sadd.s32 0, 0
    %s55 = smul.u32 4, %s54
    %p56 = scmp.lt.s32.totalorder %s55, 3
    %s57 = scalar_select %p56, %s55, 3
    %s58 = smul.addr %s57, 2
    %s59 = scalar_lea.vmem %s0, %s58
    %s60 = sadd.s32 0, 0
    %s61 = smul.u32 4, %s60
    %s62 = sadd.s32 0, 0
    %s63 = smul.u32 4, %s62
    %p64 = scmp.lt.s32.totalorder %s63, 3
    %s65 = scalar_select %p64, %s63, 3
    %s66 = smul.addr %s65, 8
    %s67 = scalar_lea.vmem %s1, %s66
    %s68 = sadd.s32 0, 0
    %s69 = smul.u32 4, %s68
    %v70 = vld [vmem:[%s59] ss:$2 sm:$0xf]
    %s71 = scalar_lea.vmem %s59, 1
    %v72 = vld [vmem:[%s71] ss:$2 sm:$0xf]
    %v73 = vrcp.pop %v72
    %v74 = vmul.f32 %v70, %v73
    %v75 = vtanh.pop %v74
    %v76 = vld [vmem:[#allocation3] sm:$0xff]
    %v78 = vlaneseq
    %v79 = vshrl.u32 %v78, 7
    %v80 = vsub.s32 0, %v79
    %v81 = vrot.slane %v75, %v80
    %v82 = vlaneseq
    %v83 = vshrl.u32 %v82, 7
    %v84 = vsub.s32 1, %v83
    %v85 = vrot.slane %v75, %v84
    %v86 = vlaneseq
    %v87 = vshrl.u32 %v86, 7
    %v88 = vsub.s32 2, %v87
    %v89 = vrot.slane %v75, %v88
    %v90 = vlaneseq
    %v91 = vshrl.u32 %v90, 7
    %v92 = vsub.s32 3, %v91
    %v93 = vrot.slane %v75, %v92
    %99 = vset.pattern.permute.xlu0 0
    %100 = vperm.xlu0 %99, %v76
    %v101 = vpop.permute.xlu0 %100
    %v103 = vsub.f32 %v81, %v101
    %v104 = vsub.f32 %v85, %v101
    %v105 = vsub.f32 %v89, %v101
    %v106 = vsub.f32 %v93, %v101
    %v107 = vand.u32 2147483647, %v103
    %v108 = vand.u32 2147483647, %v104
    %v109 = vand.u32 2147483647, %v105
    %v110 = vand.u32 2147483647, %v106
    %v111 = vmul.f32 %v107, %v107
    %v112 = vmul.f32 %v108, %v108
    %v113 = vmul.f32 %v109, %v109
    %v114 = vmul.f32 %v110, %v110
    %v115 = vmul.f32 %v111, %v107
    %v116 = vmul.f32 %v112, %v108
    %v117 = vmul.f32 %v113, %v109
    %v118 = vmul.f32 %v114, %v110
    %v119 = vsub.f32 0.0, %v115
    %v120 = vsub.f32 0.0, %v116
    %v121 = vsub.f32 0.0, %v117
    %v122 = vsub.f32 0.0, %v118
    %v123 = vmul.f32 %v119, 1.442695
    %v124 = vpow.pop %v123
    %v125 = vmul.f32 %v120, 1.442695
    %v126 = vpow.pop %v125
    %v127 = vmul.f32 %v121, 1.442695
    %v128 = vpow.pop %v127
    %v129 = vmul.f32 %v122, 1.442695
    %v130 = vpow.pop %v129
    %v131 = vrot.slane %v124, 4
    %v132 = vadd.f32 %v124, %v131
    %v133 = vrot.slane %v132, 2
    %v134 = vadd.f32 %v132, %v133
    %v135 = vrot.slane %v134, 1
    %v136 = vadd.f32 %v134, %v135
    %v137 = vrot.slane %v126, 4
    %v138 = vadd.f32 %v126, %v137
    %v139 = vrot.slane %v138, 2
    %v140 = vadd.f32 %v138, %v139
    %v141 = vrot.slane %v140, 1
    %v142 = vadd.f32 %v140, %v141
    %v143 = vrot.slane %v128, 4
    %v144 = vadd.f32 %v128, %v143
    %v145 = vrot.slane %v144, 2
    %v146 = vadd.f32 %v144, %v145
    %v147 = vrot.slane %v146, 1
    %v148 = vadd.f32 %v146, %v147
    %v149 = vrot.slane %v130, 4
    %v150 = vadd.f32 %v130, %v149
    %v151 = vrot.slane %v150, 2
    %v152 = vadd.f32 %v150, %v151
    %v153 = vrot.slane %v152, 1
    %v154 = vadd.f32 %v152, %v153
    %v155 = vadd.f32 %v136, 1e-08
    %v156 = vadd.f32 %v142, 1e-08
    %v157 = vadd.f32 %v148, 1e-08
    %v158 = vadd.f32 %v154, 1e-08
    %v159 = vrcp.pop %v155
    %v160 = vrcp.pop %v156
    %v161 = vrcp.pop %v157
    %v162 = vrcp.pop %v158
    %v163 = vld [vmem:[%s67] sm:$0xff]
    %v164 = vld [vmem:[%s67 + $0x8] sm:$0xff]
    %v165 = vld [vmem:[%s67 + $0x10] sm:$0xff]
    %v166 = vld [vmem:[%s67 + $0x18] sm:$0xff]
    %v167 = vmul.f32 %v124, %v159
    %v168 = vmul.f32 %v126, %v160
    %v169 = vmul.f32 %v128, %v161
    %v170 = vmul.f32 %v130, %v162
    %v171 = vmul.f32 %v163, %v167
    %v172 = vmul.f32 %v164, %v168
    %v173 = vmul.f32 %v165, %v169
    %v174 = vmul.f32 %v166, %v170
    %p175 = scmp.eq.s32.totalorder 0, 0
    // Predicated region
    $region18: #{forward.1} parent=1 // pred_check
      %p176 = pneg %p175
    $region19: #{forward.1} parent=1 // pred_check_branch
      %178 = sbr.rel (%p176) target = $region21
    $region20: #{forward.1} parent=1 // pred_region
      %179 = vst [vmem:[#allocation2] sm:$0xff] 0.0
      %180 = vst [vmem:[#allocation2 + $0x8] sm:$0xff] 0.0
      %181 = vst [vmem:[#allocation2 + $0x10] sm:$0xff] 0.0
      %182 = vst [vmem:[#allocation2 + $0x18] sm:$0xff] 0.0
    $region21: #{forward.1} parent=1 // pred_fallthru
      _
    %v183 = vld [vmem:[#allocation2] sm:$0xff]
    %v184 = vld [vmem:[#allocation2 + $0x8] sm:$0xff]
    %v185 = vld [vmem:[#allocation2 + $0x10] sm:$0xff]
    %v186 = vld [vmem:[#allocation2 + $0x18] sm:$0xff]
    %v187 = vadd.f32 %v183, %v171
    %v188 = vadd.f32 %v184, %v172
    %v189 = vadd.f32 %v185, %v173
    %v190 = vadd.f32 %v186, %v174
    %191 = vst [vmem:[#allocation2] sm:$0xff] %v187
    %192 = vst [vmem:[#allocation2 + $0x8] sm:$0xff] %v188
    %193 = vst [vmem:[#allocation2 + $0x10] sm:$0xff] %v189
    %194 = vst [vmem:[#allocation2 + $0x18] sm:$0xff] %v190
    // Predicated region
    $region22: #{forward.1} parent=1 // pred_check
      %p195 = pneg %p175
    $region23: #{forward.1} parent=1 // pred_check_branch
      %197 = sbr.rel (%p195) target = $region25
    $region24: #{forward.1} parent=1 // pred_region
      %v198 = vld [vmem:[#allocation2] sm:$0xff]
      %v199 = vld [vmem:[#allocation2 + $0x8] sm:$0xff]
      %v200 = vld [vmem:[#allocation2 + $0x10] sm:$0xff]
      %v201 = vld [vmem:[#allocation2 + $0x18] sm:$0xff]
      %v202 = vadd.f32 %v198, %v199
      %v203 = vadd.f32 %v202, %v200
      %v204 = vadd.f32 %v203, %v201
      %205 = vadd.xlane.f32.xlu0 %v204
      %v206 = vpop.xlane.xlu0 %205
      %vm207 = vcmask 7168
      %208 = vst.msk [vmem:[%s3] sm:$0xff] %vm207, %v206
    $region25: #{forward.1} parent=1 // pred_fallthru
      _
    // Predicated region
    $region26: #{forward.1} parent=1 // pred_check
      _
    $region27: #{forward.1} parent=1 // pred_check_branch
      %210 = sbr.rel (0) target = $region29
    $region28: #{forward.1} parent=1 // pred_region
      _
    $region29: #{forward.1} parent=1 // pred_fallthru
      _
    // Predicated region
    $region30: #{forward.1} parent=1 // pred_check
      _
    $region31: #{forward.1} parent=1 // pred_check_branch
      %212 = sbr.rel (0) target = $region33
    $region32: #{forward.1} parent=1 // pred_region
      _
    $region33: #{forward.1} parent=1 // pred_fallthru
      _
    %213 = vsyncpa [#allocation4], 1

</llo_original>
